<compile_context>
chip_gen: v6e
topology: v6e:2x2x1
jax: 0.10.0
libtpu: 0.0.40
codegen_flags: <defaults>
</compile_context>

<pallas_src>
import jax
import jax.numpy as jnp
from jax.experimental import pallas as pl
from jax.experimental.pallas import tpu as pltpu


def _ensemble_tiled_kernel(x_ref, w1_ref, w2_ref, b1_ref, b2_ref, o_ref, acc_ref):
    """Compute one (tm, tn) output tile, reducing over the K grid axis (axis 2).

    Both sub-model weight tiles are averaged in-kernel; the accumulator holds
    x @ (w1 + w2) in f32 and the epilogue applies (+ b1 + b2) * 0.5, which is
    algebraically identical to (x@w1 + b1 + x@w2 + b2) / 2.
    """
    k = pl.program_id(2)

    @pl.when(k == 0)
    def _():
        acc_ref[...] = jnp.zeros_like(acc_ref)

    # VPU add of the two streamed weight tiles — hidden under the MXU dot /
    # weight DMA for this memory-bound shape.
    w_sum = w1_ref[...] + w2_ref[...]
    acc_ref[...] += jnp.dot(x_ref[...], w_sum,
                            preferred_element_type=jnp.float32)

    @pl.when(k == pl.num_programs(2) - 1)
    def _():
        o_ref[...] = ((acc_ref[...] + b1_ref[...] + b2_ref[...]) * 0.5
                      ).astype(o_ref.dtype)


def _clamp_tile(dim: int, preferred: int) -> int:
    """Pick a tile size <= preferred that evenly divides `dim`.

    If the dim is already smaller than the preferred tile, use the full dim
    (Pallas allows a block dim equal to the full array dim regardless of the
    (8, 128) divisibility rule).
    """
    if dim <= preferred:
        return dim
    t = preferred
    while dim % t:
        t //= 2
    return max(t, 1)


def ensemble2_forward(x_nchw, w1, b1, w2, b2, *,
                      compute_dtype=jnp.float32,
                      tm=256, tn=1024, tk=2048):
    """Averaged-logits ensemble of two linear classifiers over flattened x.

    x_nchw : [B, C, H, W]
    w1, w2 : [D, N]   (D = C*H*W)
    b1, b2 : [N]
    returns: [B, N] float32

    Tiling notes (per generation):
      * default (tm, tn, tk) = (256, 1024, 2048): f32 weight tiles double-
        buffered are ~2 * 2 * 8 MiB = 32 MiB plus x/acc/out — under the 48 MiB
        limit set below, so it fits v7x's 64 MiB physical VMEM and easily fits
        v5e/v6e's 128 MiB.  bf16 operands halve that.
      * tn defaults to a multiple of 256 (v6e/v7x MXU width); at toy N it
        clamps to the full class dim.
      * M/N grid axes are "parallel" so v7x's two TensorCores split the weight
        stream; K is the reduction axis and comes last.
    """
    B = x_nchw.shape[0]
    D = int(x_nchw.shape[1] * x_nchw.shape[2] * x_nchw.shape[3])
    N = w1.shape[1]

    # Same flatten order as torch x.view(B, -1).
    x2d = x_nchw.reshape(B, D).astype(compute_dtype)
    w1c = w1.astype(compute_dtype)          # no-op for the default f32 path
    w2c = w2.astype(compute_dtype)
    b1r = b1.reshape(1, N).astype(jnp.float32)
    b2r = b2.reshape(1, N).astype(jnp.float32)

    tm_e = _clamp_tile(B, tm)
    tn_e = _clamp_tile(N, tn)
    tk_e = _clamp_tile(D, tk)
    grid = (B // tm_e, N // tn_e, D // tk_e)

    out = pl.pallas_call(
        _ensemble_tiled_kernel,
        out_shape=jax.ShapeDtypeStruct((B, N), jnp.float32),
        grid_spec=pltpu.PrefetchScalarGridSpec(
            num_scalar_prefetch=0,
            grid=grid,
            in_specs=[
                pl.BlockSpec((tm_e, tk_e), lambda i, j, k: (i, k)),  # x
                pl.BlockSpec((tk_e, tn_e), lambda i, j, k: (k, j)),  # w1
                pl.BlockSpec((tk_e, tn_e), lambda i, j, k: (k, j)),  # w2
                pl.BlockSpec((1, tn_e),   lambda i, j, k: (0, j)),   # b1
                pl.BlockSpec((1, tn_e),   lambda i, j, k: (0, j)),   # b2
            ],
            out_specs=pl.BlockSpec((tm_e, tn_e), lambda i, j, k: (i, j)),
            scratch_shapes=[pltpu.VMEM((tm_e, tn_e), jnp.float32)],
        ),
        compiler_params=pltpu.CompilerParams(
            dimension_semantics=("parallel", "parallel", "arbitrary"),
            vmem_limit_bytes=48 * 1024 * 1024,
        ),
    )(x2d, w1c, w2c, b1r, b2r)

    return out


if __name__ == "__main__":
    # Small, deterministic setup consistent with an NCHW image classifier.
    B, C, H, W = 2, 4, 16, 16
    D = C * H * W
    NUM_CLASSES = 10

    key = jax.random.PRNGKey(0)
    kx, kw1, kb1, kw2, kb2 = jax.random.split(key, 5)

    x = jax.random.normal(kx, (B, C, H, W), dtype=jnp.float32)
    # Deterministic "model1" / "model2" parameters (synthetic, not a checkpoint).
    w1 = jax.random.normal(kw1, (D, NUM_CLASSES), dtype=jnp.float32) * 0.02
    b1 = jax.random.normal(kb1, (NUM_CLASSES,), dtype=jnp.float32) * 0.02
    w2 = jax.random.normal(kw2, (D, NUM_CLASSES), dtype=jnp.float32) * 0.02
    b2 = jax.random.normal(kb2, (NUM_CLASSES,), dtype=jnp.float32) * 0.02

    # Reference in plain JAX: the ORIGINAL (un-fused) ensemble math.
    x2d = x.reshape(B, D)
    ref = ((x2d @ w1 + b1) + (x2d @ w2 + b2)) / 2.0

    # f32 path (default): strict check.  tk=512 so the K reduction axis has
    # more than one grid step even at this toy size (exercises the
    # accumulator init/finalize path).
    logits_f32 = ensemble2_forward(x, w1, b1, w2, b2, tk=512)
    jax.block_until_ready(logits_f32)
    assert logits_f32.shape == (B, NUM_CLASSES)
    assert jnp.allclose(logits_f32, ref, atol=1e-4, rtol=1e-4)

    # Optional bf16-operand path (halves weight DMA bytes; f32 accumulate):
    # loose-tolerance check.
    logits_bf16 = ensemble2_forward(x, w1, b1, w2, b2, tk=512,
                                    compute_dtype=jnp.bfloat16)
    jax.block_until_ready(logits_bf16)
    assert logits_bf16.shape == (B, NUM_CLASSES)
    assert jnp.allclose(logits_bf16, ref, atol=1e-1, rtol=1e-1)

    print("KERNEL_OK")
</pallas_src>

<mosaic_0001>
module attributes {stable_mosaic.version = 11 : i64} {
  func.func @_ensemble_tiled_kernel(%arg0: i32, %arg1: i32, %arg2: i32, %arg3: memref<2x512xf32, #tpu.memory_space<vmem>>, %arg4: memref<512x10xf32, #tpu.memory_space<vmem>>, %arg5: memref<512x10xf32, #tpu.memory_space<vmem>>, %arg6: memref<1x10xf32, #tpu.memory_space<vmem>>, %arg7: memref<1x10xf32, #tpu.memory_space<vmem>>, %arg8: memref<2x10xf32, #tpu.memory_space<vmem>>, %arg9: memref<2x10xf32, #tpu.memory_space<vmem>>) attributes {dimension_semantics = [#tpu.dimension_semantics<parallel>, #tpu.dimension_semantics<parallel>, #tpu.dimension_semantics<arbitrary>], iteration_bounds = array<i64: 1, 1, 2>, scalar_prefetch = 0 : i64, scratch_operands = 1 : i64, tpu.core_type = #tpu.core_type<tc>, window_params = [{transform_indices = @transform_0, window_bounds = array<i64: 2, 512>}, {transform_indices = @transform_1, window_bounds = array<i64: 512, 10>}, {transform_indices = @transform_2, window_bounds = array<i64: 512, 10>}, {transform_indices = @transform_3, window_bounds = array<i64: 1, 10>}, {transform_indices = @transform_4, window_bounds = array<i64: 1, 10>}, {transform_indices = @transform_5, window_bounds = array<i64: 2, 10>}]} {
    %c0_i32 = arith.constant 0 : i32
    %0 = arith.cmpi eq, %arg2, %c0_i32 : i32
    %1 = arith.extui %0 : i1 to i32
    %c0_i32_0 = arith.constant 0 : i32
    %2 = arith.cmpi ne, %1, %c0_i32_0 : i32
    scf.if %2 {
      %cst_11 = arith.constant 0.000000e+00 : f32
      %14 = vector.broadcast %cst_11 : f32 to vector<2x10xf32>
      %c0_12 = arith.constant 0 : index
      %c0_13 = arith.constant 0 : index
      %15 = vector.load %arg9[%c0_12, %c0_13] : memref<2x10xf32, #tpu.memory_space<vmem>>, vector<2x10xf32>
      tpu.vector_store %arg9[%c0_12, %c0_13], %14 {strides = array<i32>} : memref<2x10xf32, #tpu.memory_space<vmem>>, vector<2x10xf32>,
    } else {
    }
    %c0 = arith.constant 0 : index
    %c0_1 = arith.constant 0 : index
    %3 = vector.load %arg4[%c0, %c0_1] : memref<512x10xf32, #tpu.memory_space<vmem>>, vector<512x10xf32>
    %c0_2 = arith.constant 0 : index
    %c0_3 = arith.constant 0 : index
    %4 = vector.load %arg5[%c0_2, %c0_3] : memref<512x10xf32, #tpu.memory_space<vmem>>, vector<512x10xf32>
    %5 = arith.addf %3, %4 : vector<512x10xf32>
    %c0_4 = arith.constant 0 : index
    %c0_5 = arith.constant 0 : index
    %6 = vector.load %arg9[%c0_4, %c0_5] : memref<2x10xf32, #tpu.memory_space<vmem>>, vector<2x10xf32>
    %c0_6 = arith.constant 0 : index
    %c0_7 = arith.constant 0 : index
    %7 = vector.load %arg3[%c0_6, %c0_7] : memref<2x512xf32, #tpu.memory_space<vmem>>, vector<2x512xf32>
    %cst = arith.constant dense<0.000000e+00> : vector<2x10xf32>
    %8 = tpu.matmul %7, %5, %cst {dimension_numbers = #tpu.dot_dimension_numbers<[1], [0], [0], [1], [0, 0, 1, 1], [], []>} : vector<2x512xf32>, vector<512x10xf32>, vector<2x10xf32> -> vector<2x10xf32>
    %9 = arith.addf %6, %8 : vector<2x10xf32>
    %c0_8 = arith.constant 0 : index
    %c0_9 = arith.constant 0 : index
    %10 = vector.load %arg9[%c0_8, %c0_9] : memref<2x10xf32, #tpu.memory_space<vmem>>, vector<2x10xf32>
    tpu.vector_store %arg9[%c0_8, %c0_9], %9 {strides = array<i32>} : memref<2x10xf32, #tpu.memory_space<vmem>>, vector<2x10xf32>,
    %c1_i32 = arith.constant 1 : i32
    %11 = arith.cmpi eq, %arg2, %c1_i32 : i32
    %12 = arith.extui %11 : i1 to i32
    %c0_i32_10 = arith.constant 0 : i32
    %13 = arith.cmpi ne, %12, %c0_i32_10 : i32
    scf.if %13 {
      %c0_11 = arith.constant 0 : index
      %c0_12 = arith.constant 0 : index
      %14 = vector.load %arg9[%c0_11, %c0_12] : memref<2x10xf32, #tpu.memory_space<vmem>>, vector<2x10xf32>
      %c0_13 = arith.constant 0 : index
      %c0_14 = arith.constant 0 : index
      %15 = vector.load %arg6[%c0_13, %c0_14] : memref<1x10xf32, #tpu.memory_space<vmem>>, vector<1x10xf32>
      %16 = vector.broadcast %15 : vector<1x10xf32> to vector<2x10xf32>
      %17 = arith.addf %14, %16 : vector<2x10xf32>
      %c0_15 = arith.constant 0 : index
      %c0_16 = arith.constant 0 : index
      %18 = vector.load %arg7[%c0_15, %c0_16] : memref<1x10xf32, #tpu.memory_space<vmem>>, vector<1x10xf32>
      %19 = vector.broadcast %18 : vector<1x10xf32> to vector<2x10xf32>
      %20 = arith.addf %17, %19 : vector<2x10xf32>
      %cst_17 = arith.constant 5.000000e-01 : f32
      %21 = vector.broadcast %cst_17 : f32 to vector<2x10xf32>
      %22 = arith.mulf %20, %21 : vector<2x10xf32>
      %c0_18 = arith.constant 0 : index
      %c0_19 = arith.constant 0 : index
      %23 = vector.load %arg8[%c0_18, %c0_19] : memref<2x10xf32, #tpu.memory_space<vmem>>, vector<2x10xf32>
      tpu.vector_store %arg8[%c0_18, %c0_19], %22 {strides = array<i32>} : memref<2x10xf32, #tpu.memory_space<vmem>>, vector<2x10xf32>,
    } else {
    }
    return
  }
  func.func @transform_0(%arg0: i32, %arg1: i32, %arg2: i32) -> (i32, i32) {
    %c0_i32 = arith.constant 0 : i32
    return %arg0, %arg2 : i32, i32
  }
  func.func @transform_1(%arg0: i32, %arg1: i32, %arg2: i32) -> (i32, i32) {
    %c0_i32 = arith.constant 0 : i32
    return %arg2, %arg1 : i32, i32
  }
  func.func @transform_2(%arg0: i32, %arg1: i32, %arg2: i32) -> (i32, i32) {
    %c0_i32 = arith.constant 0 : i32
    return %arg2, %arg1 : i32, i32
  }
  func.func @transform_3(%arg0: i32, %arg1: i32, %arg2: i32) -> (i32, i32) {
    %c0_i32 = arith.constant 0 : i32
    %c0_i32_0 = arith.constant 0 : i32
    return %c0_i32, %arg1 : i32, i32
  }
  func.func @transform_4(%arg0: i32, %arg1: i32, %arg2: i32) -> (i32, i32) {
    %c0_i32 = arith.constant 0 : i32
    %c0_i32_0 = arith.constant 0 : i32
    return %c0_i32, %arg1 : i32, i32
  }
  func.func @transform_5(%arg0: i32, %arg1: i32, %arg2: i32) -> (i32, i32) {
    %c0_i32 = arith.constant 0 : i32
    return %arg0, %arg1 : i32, i32
  }
}

</mosaic_0001>

<llo_original>
// kernel: tpu_custom_call.1
$region0: #{tpu_custom_call.1}
  #allocation0 [shape = 'u32[]', space=smem, size = 0x4, offset = 0x4, fixed_abs, tag = 'smem constant byte address 0x4 - core index']
  #allocation1 [shape = 'u32[144,128]{1,0:T(1,128)}', space=vmem, size = 0x12000, scoped, tag = 'internal scratch']
  #allocation2 [shape = 'f32[2,10]{1,0:T(2,128)}', space=vmem, size = 0x400, scoped, tag = 'scratch operand']
  %s0 = inlined_call_operand.vmem [shape: f32[2,1024], index: 0, kind: input, shape index: {}]
  %s1 = inlined_call_operand.vmem [shape: f32[1024,10], index: 1, kind: input, shape index: {}]
  %s2 = inlined_call_operand.vmem [shape: f32[1024,10], index: 2, kind: input, shape index: {}]
  %s3 = inlined_call_operand.vmem [shape: f32[1,10], index: 3, kind: input, shape index: {}]
  %s4 = inlined_call_operand.vmem [shape: f32[1,10], index: 4, kind: input, shape index: {}]
  %s5 = inlined_call_operand.hbm [shape: f32[2,10], index: 5, kind: output, shape index: {}]
  %s6 = sld [smem:[#allocation0]]
  $region61: #{tpu_custom_call.1} parent=0
    _
  %s8 = ssub.s32 1, %s6
  %s9 = scalar_select 0, %s8, %s6
  $region1: #{tpu_custom_call.1} parent=0
    #allocation3 [shape = 'u8[1024]{0}', space=vmem, size = 0x400, scoped, tag = 'output window, operand 0, single buffered']
    #allocation4 [shape = 's32[2]{0}', space=sflag, size = 0x8, scoped, tag = 'scoped memory for tpu_custom_call.1']
    %10 = vsyncpa [#allocation4], 0
    loop: start=0, step=1, limit=4
    $region2: #{tpu_custom_call.1} parent=1 // loop_pre_header
      _
    $region3: #{tpu_custom_call.1} parent=1 // loop_header
      %s12 = sphi 0, %s16
      %p13 = scmp.ge.s32.totalorder %s12, 4
      %s19 = sphi 0, %s38
      %s20 = sphi 0, %s34
      %s21 = sphi 0, %s30
      %s22 = sphi 0, %s19
      %s23 = sphi 0, %s20
      %s24 = sphi 0, %s21
      %s25 = sphi 0, %s22
      %s26 = sphi 0, %s23
      %s27 = sphi 0, %s24
      %s43 = sphi 0, %s45
      %s46 = sphi 0, %s43
      %s47 = sphi 0, %s46
      %s63 = sphi 0, %s47
      %s71 = sphi 0, %s73
      %s74 = sphi 0, %s71
      %s75 = sphi 0, %s74
      %s91 = sphi 0, %s75
      %s99 = sphi 0, %s101
      %s102 = sphi 0, %s99
      %s103 = sphi 0, %s102
      %s119 = sphi 0, %s103
      %s125 = sphi 0, %s127
      %s128 = sphi 0, %s125
      %s129 = sphi 0, %s128
      %s145 = sphi 0, %s129
      %s151 = sphi 0, %s153
      %s154 = sphi 0, %s151
      %s155 = sphi 0, %s154
      %s171 = sphi 0, %s155
      %s179 = sphi 0, %s181
      %s182 = sphi 0, %s179
      %s183 = sphi 0, %s182
      %s199 = sphi 0, %s183
    $region4: #{tpu_custom_call.1} parent=1 // loop_header_branch
      %15 = sbr.rel (%p13) target = $region8
    $region5: #{tpu_custom_call.1} parent=1 // loop_body
      %s17 = ssub.s32 %s12, 1
      %s18 = ssub.s32 %s12, 2
      %s28 = sadd.s32 1, %s21
      %p29 = scmp.ge.s32.totalorder %s28, 2
      %s30 = scalar_select %p29, 0, %s28
      %s31 = sadd.s32 1, %s20
      %s32 = scalar_select %p29, %s31, %s20
      %p33 = scmp.ge.s32.totalorder %s32, 1
      %s34 = scalar_select %p33, 0, %s32
      %s35 = sadd.s32 1, %s19
      %s36 = scalar_select %p33, %s35, %s19
      %p37 = scmp.ge.s32.totalorder %s36, 1
      %s38 = scalar_select %p37, 0, %s36
      %s39 = ssub.s32 %s19, %s38
      %s40 = ssub.s32 %s21, %s30
      %s41 = sor.u32 %s39, %s40
      %p42 = scmp.eq.s32.totalorder %s41, 0
      %s44 = sadd.s32 %s43, 1
      %s45 = scalar_select %p42, %s43, %s44
      %p48 = pneg %p42
      %p49 = scmp.eq.s32.totalorder %s12, 1
      %p50 = por %p48, %p49
      %p51 = scmp.ne.s32.totalorder %s43, %s46
      %p52 = scmp.eq.s32.totalorder %s12, 0
      %p53 = por %p51, %p52
      %p54 = scmp.ne.s32.totalorder %s43, %s46
      %p55 = scmp.eq.s32.totalorder %s17, 1
      %p56 = por %p54, %p55
      %p57 = scmp.ne.s32.totalorder %s46, %s47
      %p58 = scmp.eq.s32.totalorder %s17, 0
      %p59 = por %p57, %p58
      %p60 = scmp.ne.s32.totalorder %s46, %s47
      %p61 = scmp.eq.s32.totalorder %s18, 1
      %p62 = por %p60, %p61
      %p64 = scmp.ne.s32.totalorder %s47, %s63
      %p65 = scmp.eq.s32.totalorder %s18, 0
      %p66 = por %p64, %p65
      %s67 = ssub.s32 %s21, %s30
      %s68 = ssub.s32 %s20, %s34
      %s69 = sor.u32 %s67, %s68
      %p70 = scmp.eq.s32.totalorder %s69, 0
      %s72 = sadd.s32 %s71, 1
      %s73 = scalar_select %p70, %s71, %s72
      %p76 = pneg %p70
      %p77 = scmp.eq.s32.totalorder %s12, 1
      %p78 = por %p76, %p77
      %p79 = scmp.ne.s32.totalorder %s71, %s74
      %p80 = scmp.eq.s32.totalorder %s12, 0
      %p81 = por %p79, %p80
      %p82 = scmp.ne.s32.totalorder %s71, %s74
      %p83 = scmp.eq.s32.totalorder %s17, 1
      %p84 = por %p82, %p83
      %p85 = scmp.ne.s32.totalorder %s74, %s75
      %p86 = scmp.eq.s32.totalorder %s17, 0
      %p87 = por %p85, %p86
      %p88 = scmp.ne.s32.totalorder %s74, %s75
      %p89 = scmp.eq.s32.totalorder %s18, 1
      %p90 = por %p88, %p89
      %p92 = scmp.ne.s32.totalorder %s75, %s91
      %p93 = scmp.eq.s32.totalorder %s18, 0
      %p94 = por %p92, %p93
      %s95 = ssub.s32 %s21, %s30
      %s96 = ssub.s32 %s20, %s34
      %s97 = sor.u32 %s95, %s96
      %p98 = scmp.eq.s32.totalorder %s97, 0
      %s100 = sadd.s32 %s99, 1
      %s101 = scalar_select %p98, %s99, %s100
      %p104 = pneg %p98
      %p105 = scmp.eq.s32.totalorder %s12, 1
      %p106 = por %p104, %p105
      %p107 = scmp.ne.s32.totalorder %s99, %s102
      %p108 = scmp.eq.s32.totalorder %s12, 0
      %p109 = por %p107, %p108
      %p110 = scmp.ne.s32.totalorder %s99, %s102
      %p111 = scmp.eq.s32.totalorder %s17, 1
      %p112 = por %p110, %p111
      %p113 = scmp.ne.s32.totalorder %s102, %s103
      %p114 = scmp.eq.s32.totalorder %s17, 0
      %p115 = por %p113, %p114
      %p116 = scmp.ne.s32.totalorder %s102, %s103
      %p117 = scmp.eq.s32.totalorder %s18, 1
      %p118 = por %p116, %p117
      %p120 = scmp.ne.s32.totalorder %s103, %s119
      %p121 = scmp.eq.s32.totalorder %s18, 0
      %p122 = por %p120, %p121
      %s123 = ssub.s32 %s20, %s34
      %p124 = scmp.eq.s32.totalorder %s123, 0
      %s126 = sadd.s32 %s125, 1
      %s127 = scalar_select %p124, %s125, %s126
      %p130 = pneg %p124
      %p131 = scmp.eq.s32.totalorder %s12, 1
      %p132 = por %p130, %p131
      %p133 = scmp.ne.s32.totalorder %s125, %s128
      %p134 = scmp.eq.s32.totalorder %s12, 0
      %p135 = por %p133, %p134
      %p136 = scmp.ne.s32.totalorder %s125, %s128
      %p137 = scmp.eq.s32.totalorder %s17, 1
      %p138 = por %p136, %p137
      %p139 = scmp.ne.s32.totalorder %s128, %s129
      %p140 = scmp.eq.s32.totalorder %s17, 0
      %p141 = por %p139, %p140
      %p142 = scmp.ne.s32.totalorder %s128, %s129
      %p143 = scmp.eq.s32.totalorder %s18, 1
      %p144 = por %p142, %p143
      %p146 = scmp.ne.s32.totalorder %s129, %s145
      %p147 = scmp.eq.s32.totalorder %s18, 0
      %p148 = por %p146, %p147
      %s149 = ssub.s32 %s20, %s34
      %p150 = scmp.eq.s32.totalorder %s149, 0
      %s152 = sadd.s32 %s151, 1
      %s153 = scalar_select %p150, %s151, %s152
      %p156 = pneg %p150
      %p157 = scmp.eq.s32.totalorder %s12, 1
      %p158 = por %p156, %p157
      %p159 = scmp.ne.s32.totalorder %s151, %s154
      %p160 = scmp.eq.s32.totalorder %s12, 0
      %p161 = por %p159, %p160
      %p162 = scmp.ne.s32.totalorder %s151, %s154
      %p163 = scmp.eq.s32.totalorder %s17, 1
      %p164 = por %p162, %p163
      %p165 = scmp.ne.s32.totalorder %s154, %s155
      %p166 = scmp.eq.s32.totalorder %s17, 0
      %p167 = por %p165, %p166
      %p168 = scmp.ne.s32.totalorder %s154, %s155
      %p169 = scmp.eq.s32.totalorder %s18, 1
      %p170 = por %p168, %p169
      %p172 = scmp.ne.s32.totalorder %s155, %s171
      %p173 = scmp.eq.s32.totalorder %s18, 0
      %p174 = por %p172, %p173
      %s175 = ssub.s32 %s19, %s38
      %s176 = ssub.s32 %s20, %s34
      %s177 = sor.u32 %s175, %s176
      %p178 = scmp.eq.s32.totalorder %s177, 0
      %s180 = sadd.s32 %s179, 1
      %s181 = scalar_select %p178, %s179, %s180
      %p184 = pneg %p178
      %p185 = scmp.eq.s32.totalorder %s12, 1
      %p186 = por %p184, %p185
      %p187 = scmp.ne.s32.totalorder %s179, %s182
      %p188 = scmp.eq.s32.totalorder %s12, 0
      %p189 = por %p187, %p188
      %p190 = scmp.ne.s32.totalorder %s179, %s182
      %p191 = scmp.eq.s32.totalorder %s17, 1
      %p192 = por %p190, %p191
      %p193 = scmp.ne.s32.totalorder %s182, %s183
      %p194 = scmp.eq.s32.totalorder %s17, 0
      %p195 = por %p193, %p194
      %p196 = scmp.ne.s32.totalorder %s182, %s183
      %p197 = scmp.eq.s32.totalorder %s18, 1
      %p198 = por %p196, %p197
      %p200 = scmp.ne.s32.totalorder %s183, %s199
      %p201 = scmp.eq.s32.totalorder %s18, 0
      %p202 = por %p200, %p201
      %p203 = scmp.le.s32.totalorder 1, %s12
      %p204 = scmp.lt.s32.totalorder %s12, 3
      %p205 = pnand %p203, %p204
      %p206 = pneg %p205
      // Predicated region
      $region9: #{tpu_custom_call.1} parent=5 // pred_check
        _
      $region10: #{tpu_custom_call.1} parent=5 // pred_check_branch
        %208 = sbr.rel (%p205) target = $region12
      $region11: #{tpu_custom_call.1} parent=5 // pred_region
        %s209 = ssub.s32 %s12, 1
        // Predicated region
        $region13: #{tpu_custom_call.1} parent=11 // pred_check
          %p210 = pneg %p141
        $region14: #{tpu_custom_call.1} parent=11 // pred_check_branch
          %212 = sbr.rel (%p210) target = $region16
        $region15: #{tpu_custom_call.1} parent=11 // pred_region
          %p213 = scmp.lt.s32.totalorder %s23, 0
          %s214 = scalar_select %p213, %s23, 0
          %s215 = scalar_lea.vmem %s3, %s214
        $region16: #{tpu_custom_call.1} parent=11 // pred_fallthru
          _
        // Predicated region
        $region17: #{tpu_custom_call.1} parent=11 // pred_check
          %p216 = pneg %p167
        $region18: #{tpu_custom_call.1} parent=11 // pred_check_branch
          %218 = sbr.rel (%p216) target = $region20
        $region19: #{tpu_custom_call.1} parent=11 // pred_region
          %p219 = scmp.lt.s32.totalorder %s23, 0
          %s220 = scalar_select %p219, %s23, 0
          %s221 = scalar_lea.vmem %s4, %s220
        $region20: #{tpu_custom_call.1} parent=11 // pred_fallthru
          _
      $region12: #{tpu_custom_call.1} parent=5 // pred_fallthru
        _
      %p222 = scmp.lt.s32.totalorder %s12, 2
      // Predicated region
      $region21: #{tpu_custom_call.1} parent=5 // pred_check
        %p223 = pneg %p222
      $region22: #{tpu_custom_call.1} parent=5 // pred_check_branch
        %225 = sbr.rel (%p223) target = $region24
      $region23: #{tpu_custom_call.1} parent=5 // pred_region
        // Predicated region
        $region25: #{tpu_custom_call.1} parent=23 // pred_check
          %p226 = pneg %p53
        $region26: #{tpu_custom_call.1} parent=23 // pred_check_branch
          %228 = sbr.rel (%p226) target = $region28
        $region27: #{tpu_custom_call.1} parent=23 // pred_region
          %s229 = smul.u32 4, %s21
          %p230 = scmp.lt.s32.totalorder %s19, 0
          %s231 = scalar_select %p230, %s19, 0
          %p232 = scmp.lt.s32.totalorder %s229, 7
          %s233 = scalar_select %p232, %s229, 7
          %s234 = smul.addr %s231, 8
          %s235 = sadd.s32 %s233, %s234
          %s236 = smul.addr %s235, 2
          %s237 = scalar_lea.vmem %s0, %s236
          %s238 = smul.u32 4, %s21
        $region28: #{tpu_custom_call.1} parent=23 // pred_fallthru
          _
        // Predicated region
        $region29: #{tpu_custom_call.1} parent=23 // pred_check
          %p239 = pneg %p81
        $region30: #{tpu_custom_call.1} parent=23 // pred_check_branch
          %241 = sbr.rel (%p239) target = $region32
        $region31: #{tpu_custom_call.1} parent=23 // pred_region
          %s242 = smul.u32 64, %s21
          %p243 = scmp.lt.s32.totalorder %s242, 127
          %s244 = scalar_select %p243, %s242, 127
          %p245 = scmp.lt.s32.totalorder %s20, 0
          %s246 = scalar_select %p245, %s20, 0
          %s247 = sadd.s32 %s246, %s244
          %s248 = smul.addr %s247, 8
          %s249 = scalar_lea.vmem %s1, %s248
          %s250 = smul.u32 64, %s21
        $region32: #{tpu_custom_call.1} parent=23 // pred_fallthru
          _
        // Predicated region
        $region33: #{tpu_custom_call.1} parent=23 // pred_check
          %p251 = pneg %p109
        $region34: #{tpu_custom_call.1} parent=23 // pred_check_branch
          %253 = sbr.rel (%p251) target = $region36
        $region35: #{tpu_custom_call.1} parent=23 // pred_region
          %s254 = smul.u32 64, %s21
          %p255 = scmp.lt.s32.totalorder %s254, 127
          %s256 = scalar_select %p255, %s254, 127
          %p257 = scmp.lt.s32.totalorder %s20, 0
          %s258 = scalar_select %p257, %s20, 0
          %s259 = sadd.s32 %s258, %s256
          %s260 = smul.addr %s259, 8
          %s261 = scalar_lea.vmem %s2, %s260
          %s262 = smul.u32 64, %s21
        $region36: #{tpu_custom_call.1} parent=23 // pred_fallthru
          _
      $region24: #{tpu_custom_call.1} parent=5 // pred_fallthru
        _
      %p263 = scmp.le.s32.totalorder 1, %s12
      %p264 = scmp.lt.s32.totalorder %s12, 3
      %p265 = pnand %p263, %p264
      %p266 = pneg %p265
      // Predicated region
      $region37: #{tpu_custom_call.1} parent=5 // pred_check
        _
      $region38: #{tpu_custom_call.1} parent=5 // pred_check_branch
        %268 = sbr.rel (%p265) target = $region40
      $region39: #{tpu_custom_call.1} parent=5 // pred_region
        %s269 = ssub.s32 %s12, 1
        %s270 = smul.u32 4, %s24
        %p271 = scmp.lt.s32.totalorder %s22, 0
        %s272 = scalar_select %p271, %s22, 0
        %p273 = scmp.lt.s32.totalorder %s270, 7
        %s274 = scalar_select %p273, %s270, 7
        %s275 = smul.addr %s272, 8
        %s276 = sadd.s32 %s274, %s275
        %s277 = smul.addr %s276, 2
        %s278 = scalar_lea.vmem %s0, %s277
        %p279 = pneg %p59
        %p280 = pneg %p56
        %s281 = smul.u32 64, %s24
        %p282 = scmp.lt.s32.totalorder %s281, 127
        %s283 = scalar_select %p282, %s281, 127
        %p284 = scmp.lt.s32.totalorder %s23, 0
        %s285 = scalar_select %p284, %s23, 0
        %s286 = sadd.s32 %s285, %s283
        %s287 = smul.addr %s286, 8
        %s288 = scalar_lea.vmem %s1, %s287
        %p289 = pneg %p87
        %p290 = pneg %p84
        %s291 = smul.u32 64, %s24
        %p292 = scmp.lt.s32.totalorder %s291, 127
        %s293 = scalar_select %p292, %s291, 127
        %p294 = scmp.lt.s32.totalorder %s23, 0
        %s295 = scalar_select %p294, %s23, 0
        %s296 = sadd.s32 %s295, %s293
        %s297 = smul.addr %s296, 8
        %s298 = scalar_lea.vmem %s2, %s297
        %p299 = pneg %p115
        %p300 = pneg %p112
        %p301 = scmp.lt.s32.totalorder %s23, 0
        %s302 = scalar_select %p301, %s23, 0
        %s303 = scalar_lea.vmem %s3, %s302
        %p304 = pneg %p141
        %p305 = pneg %p138
        %p306 = scmp.lt.s32.totalorder %s23, 0
        %s307 = scalar_select %p306, %s23, 0
        %s308 = scalar_lea.vmem %s4, %s307
        %p309 = pneg %p167
        %p310 = pneg %p164
        %p311 = pneg %p195
        %p312 = pneg %p192
        %s313 = smul.u32 4, %s24
        %p314 = scmp.lt.s32.totalorder %s22, 0
        %s315 = scalar_select %p314, %s22, 0
        %p316 = scmp.lt.s32.totalorder %s313, 7
        %s317 = scalar_select %p316, %s313, 7
        %s318 = smul.addr %s315, 8
        %s319 = sadd.s32 %s317, %s318
        %s320 = smul.addr %s319, 2
        %s321 = scalar_lea.vmem %s0, %s320
        %s322 = smul.u32 4, %s24
        %s323 = smul.u32 64, %s24
        %p324 = scmp.lt.s32.totalorder %s323, 127
        %s325 = scalar_select %p324, %s323, 127
        %p326 = scmp.lt.s32.totalorder %s23, 0
        %s327 = scalar_select %p326, %s23, 0
        %s328 = sadd.s32 %s327, %s325
        %s329 = smul.addr %s328, 8
        %s330 = scalar_lea.vmem %s1, %s329
        %s331 = smul.u32 64, %s24
        %s332 = smul.u32 64, %s24
        %p333 = scmp.lt.s32.totalorder %s332, 127
        %s334 = scalar_select %p333, %s332, 127
        %p335 = scmp.lt.s32.totalorder %s23, 0
        %s336 = scalar_select %p335, %s23, 0
        %s337 = sadd.s32 %s336, %s334
        %s338 = smul.addr %s337, 8
        %s339 = scalar_lea.vmem %s2, %s338
        %s340 = smul.u32 64, %s24
        %p341 = scmp.lt.s32.totalorder %s23, 0
        %s342 = scalar_select %p341, %s23, 0
        %s343 = scalar_lea.vmem %s3, %s342
        %p344 = scmp.lt.s32.totalorder %s23, 0
        %s345 = scalar_select %p344, %s23, 0
        %s346 = scalar_lea.vmem %s4, %s345
        %p347 = scmp.eq.s32.totalorder %s24, 0
        // Predicated region
        $region41: #{tpu_custom_call.1} parent=39 // pred_check
          %p348 = pneg %p347
        $region42: #{tpu_custom_call.1} parent=39 // pred_check_branch
          %350 = sbr.rel (%p348) target = $region44
        $region43: #{tpu_custom_call.1} parent=39 // pred_region
          %vm351 = vcmask 74752
          %352 = vst.msk [vmem:[#allocation2] sm:$0x3] %vm351, 0.0
        $region44: #{tpu_custom_call.1} parent=39 // pred_fallthru
          _
        %v353 = vld [vmem:[%s330] sm:$0xff]
        %v354 = vld [vmem:[%s330 + $0x8] sm:$0xff]
        %v355 = vld [vmem:[%s330 + $0x10] sm:$0xff]
        %v356 = vld [vmem:[%s330 + $0x18] sm:$0xff]
        %v357 = vld [vmem:[%s330 + $0x20] sm:$0xff]
        %v358 = vld [vmem:[%s330 + $0x28] sm:$0xff]
        %v359 = vld [vmem:[%s330 + $0x30] sm:$0xff]
        %v360 = vld [vmem:[%s330 + $0x38] sm:$0xff]
        %v361 = vld [vmem:[%s330 + $0x40] sm:$0xff]
        %v362 = vld [vmem:[%s330 + $0x48] sm:$0xff]
        %v363 = vld [vmem:[%s330 + $0x50] sm:$0xff]
        %v364 = vld [vmem:[%s330 + $0x58] sm:$0xff]
        %v365 = vld [vmem:[%s330 + $0x60] sm:$0xff]
        %v366 = vld [vmem:[%s330 + $0x68] sm:$0xff]
        %v367 = vld [vmem:[%s330 + $0x70] sm:$0xff]
        %v368 = vld [vmem:[%s330 + $0x78] sm:$0xff]
        %v369 = vld [vmem:[%s330 + $0x80] sm:$0xff]
        %v370 = vld [vmem:[%s330 + $0x88] sm:$0xff]
        %v371 = vld [vmem:[%s330 + $0x90] sm:$0xff]
        %v372 = vld [vmem:[%s330 + $0x98] sm:$0xff]
        %v373 = vld [vmem:[%s330 + $0xa0] sm:$0xff]
        %v374 = vld [vmem:[%s330 + $0xa8] sm:$0xff]
        %v375 = vld [vmem:[%s330 + $0xb0] sm:$0xff]
        %v376 = vld [vmem:[%s330 + $0xb8] sm:$0xff]
        %v377 = vld [vmem:[%s330 + $0xc0] sm:$0xff]
        %v378 = vld [vmem:[%s330 + $0xc8] sm:$0xff]
        %v379 = vld [vmem:[%s330 + $0xd0] sm:$0xff]
        %v380 = vld [vmem:[%s330 + $0xd8] sm:$0xff]
        %v381 = vld [vmem:[%s330 + $0xe0] sm:$0xff]
        %v382 = vld [vmem:[%s330 + $0xe8] sm:$0xff]
        %v383 = vld [vmem:[%s330 + $0xf0] sm:$0xff]
        %v384 = vld [vmem:[%s330 + $0xf8] sm:$0xff]
        %v385 = vld [vmem:[%s330 + $0x100] sm:$0xff]
        %v386 = vld [vmem:[%s330 + $0x108] sm:$0xff]
        %v387 = vld [vmem:[%s330 + $0x110] sm:$0xff]
        %v388 = vld [vmem:[%s330 + $0x118] sm:$0xff]
        %v389 = vld [vmem:[%s330 + $0x120] sm:$0xff]
        %v390 = vld [vmem:[%s330 + $0x128] sm:$0xff]
        %v391 = vld [vmem:[%s330 + $0x130] sm:$0xff]
        %v392 = vld [vmem:[%s330 + $0x138] sm:$0xff]
        %v393 = vld [vmem:[%s330 + $0x140] sm:$0xff]
        %v394 = vld [vmem:[%s330 + $0x148] sm:$0xff]
        %v395 = vld [vmem:[%s330 + $0x150] sm:$0xff]
        %v396 = vld [vmem:[%s330 + $0x158] sm:$0xff]
        %v397 = vld [vmem:[%s330 + $0x160] sm:$0xff]
        %v398 = vld [vmem:[%s330 + $0x168] sm:$0xff]
        %v399 = vld [vmem:[%s330 + $0x170] sm:$0xff]
        %v400 = vld [vmem:[%s330 + $0x178] sm:$0xff]
        %v401 = vld [vmem:[%s330 + $0x180] sm:$0xff]
        %v402 = vld [vmem:[%s330 + $0x188] sm:$0xff]
        %v403 = vld [vmem:[%s330 + $0x190] sm:$0xff]
        %v404 = vld [vmem:[%s330 + $0x198] sm:$0xff]
        %v405 = vld [vmem:[%s330 + $0x1a0] sm:$0xff]
        %v406 = vld [vmem:[%s330 + $0x1a8] sm:$0xff]
        %v407 = vld [vmem:[%s330 + $0x1b0] sm:$0xff]
        %v408 = vld [vmem:[%s330 + $0x1b8] sm:$0xff]
        %v409 = vld [vmem:[%s330 + $0x1c0] sm:$0xff]
        %v410 = vld [vmem:[%s330 + $0x1c8] sm:$0xff]
        %v411 = vld [vmem:[%s330 + $0x1d0] sm:$0xff]
        %v412 = vld [vmem:[%s330 + $0x1d8] sm:$0xff]
        %v413 = vld [vmem:[%s330 + $0x1e0] sm:$0xff]
        %v414 = vld [vmem:[%s330 + $0x1e8] sm:$0xff]
        %v415 = vld [vmem:[%s330 + $0x1f0] sm:$0xff]
        %v416 = vld [vmem:[%s330 + $0x1f8] sm:$0xff]
        %v417 = vld [vmem:[%s339] sm:$0xff]
        %v418 = vld [vmem:[%s339 + $0x8] sm:$0xff]
        %v419 = vld [vmem:[%s339 + $0x10] sm:$0xff]
        %v420 = vld [vmem:[%s339 + $0x18] sm:$0xff]
        %v421 = vld [vmem:[%s339 + $0x20] sm:$0xff]
        %v422 = vld [vmem:[%s339 + $0x28] sm:$0xff]
        %v423 = vld [vmem:[%s339 + $0x30] sm:$0xff]
        %v424 = vld [vmem:[%s339 + $0x38] sm:$0xff]
        %v425 = vld [vmem:[%s339 + $0x40] sm:$0xff]
        %v426 = vld [vmem:[%s339 + $0x48] sm:$0xff]
        %v427 = vld [vmem:[%s339 + $0x50] sm:$0xff]
        %v428 = vld [vmem:[%s339 + $0x58] sm:$0xff]
        %v429 = vld [vmem:[%s339 + $0x60] sm:$0xff]
        %v430 = vld [vmem:[%s339 + $0x68] sm:$0xff]
        %v431 = vld [vmem:[%s339 + $0x70] sm:$0xff]
        %v432 = vld [vmem:[%s339 + $0x78] sm:$0xff]
        %v433 = vld [vmem:[%s339 + $0x80] sm:$0xff]
        %v434 = vld [vmem:[%s339 + $0x88] sm:$0xff]
        %v435 = vld [vmem:[%s339 + $0x90] sm:$0xff]
        %v436 = vld [vmem:[%s339 + $0x98] sm:$0xff]
        %v437 = vld [vmem:[%s339 + $0xa0] sm:$0xff]
        %v438 = vld [vmem:[%s339 + $0xa8] sm:$0xff]
        %v439 = vld [vmem:[%s339 + $0xb0] sm:$0xff]
        %v440 = vld [vmem:[%s339 + $0xb8] sm:$0xff]
        %v441 = vld [vmem:[%s339 + $0xc0] sm:$0xff]
        %v442 = vld [vmem:[%s339 + $0xc8] sm:$0xff]
        %v443 = vld [vmem:[%s339 + $0xd0] sm:$0xff]
        %v444 = vld [vmem:[%s339 + $0xd8] sm:$0xff]
        %v445 = vld [vmem:[%s339 + $0xe0] sm:$0xff]
        %v446 = vld [vmem:[%s339 + $0xe8] sm:$0xff]
        %v447 = vld [vmem:[%s339 + $0xf0] sm:$0xff]
        %v448 = vld [vmem:[%s339 + $0xf8] sm:$0xff]
        %v449 = vld [vmem:[%s339 + $0x100] sm:$0xff]
        %v450 = vld [vmem:[%s339 + $0x108] sm:$0xff]
        %v451 = vld [vmem:[%s339 + $0x110] sm:$0xff]
        %v452 = vld [vmem:[%s339 + $0x118] sm:$0xff]
        %v453 = vld [vmem:[%s339 + $0x120] sm:$0xff]
        %v454 = vld [vmem:[%s339 + $0x128] sm:$0xff]
        %v455 = vld [vmem:[%s339 + $0x130] sm:$0xff]
        %v456 = vld [vmem:[%s339 + $0x138] sm:$0xff]
        %v457 = vld [vmem:[%s339 + $0x140] sm:$0xff]
        %v458 = vld [vmem:[%s339 + $0x148] sm:$0xff]
        %v459 = vld [vmem:[%s339 + $0x150] sm:$0xff]
        %v460 = vld [vmem:[%s339 + $0x158] sm:$0xff]
        %v461 = vld [vmem:[%s339 + $0x160] sm:$0xff]
        %v462 = vld [vmem:[%s339 + $0x168] sm:$0xff]
        %v463 = vld [vmem:[%s339 + $0x170] sm:$0xff]
        %v464 = vld [vmem:[%s339 + $0x178] sm:$0xff]
        %v465 = vld [vmem:[%s339 + $0x180] sm:$0xff]
        %v466 = vld [vmem:[%s339 + $0x188] sm:$0xff]
        %v467 = vld [vmem:[%s339 + $0x190] sm:$0xff]
        %v468 = vld [vmem:[%s339 + $0x198] sm:$0xff]
        %v469 = vld [vmem:[%s339 + $0x1a0] sm:$0xff]
        %v470 = vld [vmem:[%s339 + $0x1a8] sm:$0xff]
        %v471 = vld [vmem:[%s339 + $0x1b0] sm:$0xff]
        %v472 = vld [vmem:[%s339 + $0x1b8] sm:$0xff]
        %v473 = vld [vmem:[%s339 + $0x1c0] sm:$0xff]
        %v474 = vld [vmem:[%s339 + $0x1c8] sm:$0xff]
        %v475 = vld [vmem:[%s339 + $0x1d0] sm:$0xff]
        %v476 = vld [vmem:[%s339 + $0x1d8] sm:$0xff]
        %v477 = vld [vmem:[%s339 + $0x1e0] sm:$0xff]
        %v478 = vld [vmem:[%s339 + $0x1e8] sm:$0xff]
        %v479 = vld [vmem:[%s339 + $0x1f0] sm:$0xff]
        %v480 = vld [vmem:[%s339 + $0x1f8] sm:$0xff]
        %v481 = vadd.f32 %v353, %v417
        %v482 = vadd.f32 %v354, %v418
        %v483 = vadd.f32 %v355, %v419
        %v484 = vadd.f32 %v356, %v420
        %v485 = vadd.f32 %v357, %v421
        %v486 = vadd.f32 %v358, %v422
        %v487 = vadd.f32 %v359, %v423
        %v488 = vadd.f32 %v360, %v424
        %v489 = vadd.f32 %v361, %v425
        %v490 = vadd.f32 %v362, %v426
        %v491 = vadd.f32 %v363, %v427
        %v492 = vadd.f32 %v364, %v428
        %v493 = vadd.f32 %v365, %v429
        %v494 = vadd.f32 %v366, %v430
        %v495 = vadd.f32 %v367, %v431
        %v496 = vadd.f32 %v368, %v432
        %v497 = vadd.f32 %v369, %v433
        %v498 = vadd.f32 %v370, %v434
        %v499 = vadd.f32 %v371, %v435
        %v500 = vadd.f32 %v372, %v436
        %v501 = vadd.f32 %v373, %v437
        %v502 = vadd.f32 %v374, %v438
        %v503 = vadd.f32 %v375, %v439
        %v504 = vadd.f32 %v376, %v440
        %v505 = vadd.f32 %v377, %v441
        %v506 = vadd.f32 %v378, %v442
        %v507 = vadd.f32 %v379, %v443
        %v508 = vadd.f32 %v380, %v444
        %v509 = vadd.f32 %v381, %v445
        %v510 = vadd.f32 %v382, %v446
        %v511 = vadd.f32 %v383, %v447
        %v512 = vadd.f32 %v384, %v448
        %v513 = vadd.f32 %v385, %v449
        %v514 = vadd.f32 %v386, %v450
        %v515 = vadd.f32 %v387, %v451
        %v516 = vadd.f32 %v388, %v452
        %v517 = vadd.f32 %v389, %v453
        %v518 = vadd.f32 %v390, %v454
        %v519 = vadd.f32 %v391, %v455
        %v520 = vadd.f32 %v392, %v456
        %v521 = vadd.f32 %v393, %v457
        %v522 = vadd.f32 %v394, %v458
        %v523 = vadd.f32 %v395, %v459
        %v524 = vadd.f32 %v396, %v460
        %v525 = vadd.f32 %v397, %v461
        %v526 = vadd.f32 %v398, %v462
        %v527 = vadd.f32 %v399, %v463
        %v528 = vadd.f32 %v400, %v464
        %v529 = vadd.f32 %v401, %v465
        %v530 = vadd.f32 %v402, %v466
        %v531 = vadd.f32 %v403, %v467
        %v532 = vadd.f32 %v404, %v468
        %v533 = vadd.f32 %v405, %v469
        %v534 = vadd.f32 %v406, %v470
        %v535 = vadd.f32 %v407, %v471
        %v536 = vadd.f32 %v408, %v472
        %v537 = vadd.f32 %v409, %v473
        %v538 = vadd.f32 %v410, %v474
        %v539 = vadd.f32 %v411, %v475
        %v540 = vadd.f32 %v412, %v476
        %v541 = vadd.f32 %v413, %v477
        %v542 = vadd.f32 %v414, %v478
        %v543 = vadd.f32 %v415, %v479
        %v544 = vadd.f32 %v416, %v480
        %v545 = vld [vmem:[#allocation2] sm:$0x3]
        %v546 = vld [vmem:[%s321] sm:$0xff]
        %v548 = vcombine.high %v546, %v546
        %v550 = vunpack.c.l.s4 1983009808
        %v551 = vunpack.c.0.s8 %v550
        %v552 = vlaneseq
        %v553 = vshrl.u32 %v552, 7
        %v554 = vsub.s32 %v551, %v553
        %v555 = vrot.slane %v546, %v554
        %v557 = vunpack.c.l.s4 1983009808
        %v558 = vunpack.c.0.s8 %v557
        %v559 = vlaneseq
        %v560 = vshrl.u32 %v559, 7
        %v561 = vsub.s32 %v558, %v560
        %v562 = vrot.slane %v548, %v561
        %v563 = vcombine.high %v555, %v555
        %v564 = vcombine.high %v562, %v562
        %569 = vmatprep.subr.mxu0 0.0
        %570 = vmatpush1.msra.mxu0 %v496
        %571 = vmatprep.subr.mxu0 0.0
        %572 = vmatpush1.msra.mxu0 %v495
        %573 = vmatprep.subr.mxu0 0.0
        %574 = vmatpush1.msra.mxu0 %v494
        %575 = vmatprep.subr.mxu0 0.0
        %576 = vmatpush1.msra.mxu0 %v493
        %577 = vmatprep.subr.mxu0 0.0
        %578 = vmatpush1.msra.mxu0 %v492
        %579 = vmatprep.subr.mxu0 0.0
        %580 = vmatpush1.msra.mxu0 %v491
        %581 = vmatprep.subr.mxu0 0.0
        %582 = vmatpush1.msra.mxu0 %v490
        %583 = vmatprep.subr.mxu0 0.0
        %584 = vmatpush1.msra.mxu0 %v489
        %585 = vmatprep.subr.mxu0 0.0
        %586 = vmatpush1.msra.mxu0 %v488
        %587 = vmatprep.subr.mxu0 0.0
        %588 = vmatpush1.msra.mxu0 %v487
        %589 = vmatprep.subr.mxu0 0.0
        %590 = vmatpush1.msra.mxu0 %v486
        %591 = vmatprep.subr.mxu0 0.0
        %592 = vmatpush1.msra.mxu0 %v485
        %593 = vmatprep.subr.mxu0 0.0
        %594 = vmatpush1.msra.mxu0 %v484
        %595 = vmatprep.subr.mxu0 0.0
        %596 = vmatpush1.msra.mxu0 %v483
        %597 = vmatprep.subr.mxu0 0.0
        %598 = vmatpush1.msra.mxu0 %v482
        %599 = vmatprep.subr.mxu0 0.0
        %600 = vmatpush1.msra.mxu0 %v481
        %601 = vmatprep.subr.mxu0 0.0
        %602 = vmatpush2.msra.mxu0 %v512
        %603 = vmatprep.subr.mxu0 0.0
        %604 = vmatpush2.msra.mxu0 %v511
        %605 = vmatprep.subr.mxu0 0.0
        %606 = vmatpush2.msra.mxu0 %v510
        %607 = vmatprep.subr.mxu0 0.0
        %608 = vmatpush2.msra.mxu0 %v509
        %609 = vmatprep.subr.mxu0 0.0
        %610 = vmatpush2.msra.mxu0 %v508
        %611 = vmatprep.subr.mxu0 0.0
        %612 = vmatpush2.msra.mxu0 %v507
        %613 = vmatprep.subr.mxu0 0.0
        %614 = vmatpush2.msra.mxu0 %v506
        %615 = vmatprep.subr.mxu0 0.0
        %616 = vmatpush2.msra.mxu0 %v505
        %617 = vmatprep.subr.mxu0 0.0
        %618 = vmatpush2.msra.mxu0 %v504
        %619 = vmatprep.subr.mxu0 0.0
        %620 = vmatpush2.msra.mxu0 %v503
        %621 = vmatprep.subr.mxu0 0.0
        %622 = vmatpush2.msra.mxu0 %v502
        %623 = vmatprep.subr.mxu0 0.0
        %624 = vmatpush2.msra.mxu0 %v501
        %625 = vmatprep.subr.mxu0 0.0
        %626 = vmatpush2.msra.mxu0 %v500
        %627 = vmatprep.subr.mxu0 0.0
        %628 = vmatpush2.msra.mxu0 %v499
        %629 = vmatprep.subr.mxu0 0.0
        %630 = vmatpush2.msra.mxu0 %v498
        %631 = vmatprep.subr.mxu0 0.0
        %632 = vmatpush2.msra.mxu0 %v497
        %633 = vmatprep.mubr.f32.mxu0 %v563
        %634 = vmatmul.mubr.f32.gmra.mxu0 %v555
        %v635 = vpop.f32.mrf.mxu0
        %v636 = vadd.f32 0.0, %v635
        %v637 = vpop.f32.mrf.mxu0
        %638 = vdwg.mxu0
        %639 = vmatprep.subr.mxu0 0.0
        %640 = vmatpush1.msra.mxu0 %v528
        %641 = vmatprep.subr.mxu0 0.0
        %642 = vmatpush1.msra.mxu0 %v527
        %643 = vmatprep.subr.mxu0 0.0
        %644 = vmatpush1.msra.mxu0 %v526
        %645 = vmatprep.subr.mxu0 0.0
        %646 = vmatpush1.msra.mxu0 %v525
        %647 = vmatprep.subr.mxu0 0.0
        %648 = vmatpush1.msra.mxu0 %v524
        %649 = vmatprep.subr.mxu0 0.0
        %650 = vmatpush1.msra.mxu0 %v523
        %651 = vmatprep.subr.mxu0 0.0
        %652 = vmatpush1.msra.mxu0 %v522
        %653 = vmatprep.subr.mxu0 0.0
        %654 = vmatpush1.msra.mxu0 %v521
        %655 = vmatprep.subr.mxu0 0.0
        %656 = vmatpush1.msra.mxu0 %v520
        %657 = vmatprep.subr.mxu0 0.0
        %658 = vmatpush1.msra.mxu0 %v519
        %659 = vmatprep.subr.mxu0 0.0
        %660 = vmatpush1.msra.mxu0 %v518
        %661 = vmatprep.subr.mxu0 0.0
        %662 = vmatpush1.msra.mxu0 %v517
        %663 = vmatprep.subr.mxu0 0.0
        %664 = vmatpush1.msra.mxu0 %v516
        %665 = vmatprep.subr.mxu0 0.0
        %666 = vmatpush1.msra.mxu0 %v515
        %667 = vmatprep.subr.mxu0 0.0
        %668 = vmatpush1.msra.mxu0 %v514
        %669 = vmatprep.subr.mxu0 0.0
        %670 = vmatpush1.msra.mxu0 %v513
        %671 = vmatprep.subr.mxu0 0.0
        %672 = vmatpush2.msra.mxu0 %v544
        %673 = vmatprep.subr.mxu0 0.0
        %674 = vmatpush2.msra.mxu0 %v543
        %675 = vmatprep.subr.mxu0 0.0
        %676 = vmatpush2.msra.mxu0 %v542
        %677 = vmatprep.subr.mxu0 0.0
        %678 = vmatpush2.msra.mxu0 %v541
        %679 = vmatprep.subr.mxu0 0.0
        %680 = vmatpush2.msra.mxu0 %v540
        %681 = vmatprep.subr.mxu0 0.0
        %682 = vmatpush2.msra.mxu0 %v539
        %683 = vmatprep.subr.mxu0 0.0
        %684 = vmatpush2.msra.mxu0 %v538
        %685 = vmatprep.subr.mxu0 0.0
        %686 = vmatpush2.msra.mxu0 %v537
        %687 = vmatprep.subr.mxu0 0.0
        %688 = vmatpush2.msra.mxu0 %v536
        %689 = vmatprep.subr.mxu0 0.0
        %690 = vmatpush2.msra.mxu0 %v535
        %691 = vmatprep.subr.mxu0 0.0
        %692 = vmatpush2.msra.mxu0 %v534
        %693 = vmatprep.subr.mxu0 0.0
        %694 = vmatpush2.msra.mxu0 %v533
        %695 = vmatprep.subr.mxu0 0.0
        %696 = vmatpush2.msra.mxu0 %v532
        %697 = vmatprep.subr.mxu0 0.0
        %698 = vmatpush2.msra.mxu0 %v531
        %699 = vmatprep.subr.mxu0 0.0
        %700 = vmatpush2.msra.mxu0 %v530
        %701 = vmatprep.subr.mxu0 0.0
        %702 = vmatpush2.msra.mxu0 %v529
        %703 = vmatprep.mubr.f32.mxu0 %v564
        %704 = vmatmul.mubr.f32.gmra.mxu0 %v562
        %v705 = vpop.f32.mrf.mxu0
        %v706 = vadd.f32 %v636, %v705
        %v707 = vpop.f32.mrf.mxu0
        %708 = vdwg.mxu0
        %v709 = vadd.f32 %v545, %v706
        %vm710 = vcmask 74752
        %711 = vst.msk [vmem:[#allocation2] sm:$0x3] %vm710, %v709
        %p712 = scmp.eq.s32.totalorder %s24, 1
        // Predicated region
        $region45: #{tpu_custom_call.1} parent=39 // pred_check
          %p713 = pneg %p712
        $region46: #{tpu_custom_call.1} parent=39 // pred_check_branch
          %715 = sbr.rel (%p713) target = $region48
        $region47: #{tpu_custom_call.1} parent=39 // pred_region
          %v716 = vld [vmem:[#allocation2] sm:$0x3]
          %v717 = vld [vmem:[%s343] sm:$0x1]
          %v719 = vlaneseq
          %v720 = vshrl.u32 %v719, 7
          %v721 = vsub.s32 0, %v720
          %v722 = vrot.slane %v717, %v721
          %v724 = vadd.f32 %v716, %v722
          %v725 = vld [vmem:[%s346] sm:$0x1]
          %v727 = vlaneseq
          %v728 = vshrl.u32 %v727, 7
          %v729 = vsub.s32 0, %v728
          %v730 = vrot.slane %v725, %v729
          %v732 = vadd.f32 %v724, %v730
          %v733 = vmul.f32 %v732, 0.5
          %734 = vst.msk [vmem:[#allocation3] sm:$0x3] %vm710, %v733
        $region48: #{tpu_custom_call.1} parent=39 // pred_fallthru
          _
        // Predicated region
        $region49: #{tpu_custom_call.1} parent=39 // pred_check
          %p735 = pneg %p192
        $region50: #{tpu_custom_call.1} parent=39 // pred_check_branch
          %737 = sbr.rel (%p735) target = $region52
        $region51: #{tpu_custom_call.1} parent=39 // pred_region
          %s739 = ssub.s32 32, 32
          %740 = vsyncadd [#allocation4], %s739
          %s741 = sadd.s32 %s23, %s22
          %s742 = smul.addr %s741, 32
          %s743 = scalar_lea.hbm %s5, %s742
          %s745 = sshll.u32 [#allocation3], 4
          %s746 = int_to_ptr.vmem [resolvable:$true] %s745
          %748 = dma.vmem_to_hbm [thread:$0]  %s746, 32, %s743, [#allocation4]
        $region52: #{tpu_custom_call.1} parent=39 // pred_fallthru
          _
        // Predicated region
        $region53: #{tpu_custom_call.1} parent=39 // pred_check
          %p749 = pneg %p192
        $region54: #{tpu_custom_call.1} parent=39 // pred_check_branch
          %751 = sbr.rel (%p749) target = $region56
        $region55: #{tpu_custom_call.1} parent=39 // pred_region
          %752 = dma.done [#allocation4], 32
        $region56: #{tpu_custom_call.1} parent=39 // pred_fallthru
          _
      $region40: #{tpu_custom_call.1} parent=5 // pred_fallthru
        _
      %p753 = scmp.le.s32.totalorder 2, %s12
      // Predicated region
      $region57: #{tpu_custom_call.1} parent=5 // pred_check
        %p754 = pneg %p753
      $region58: #{tpu_custom_call.1} parent=5 // pred_check_branch
        %756 = sbr.rel (%p754) target = $region60
      $region59: #{tpu_custom_call.1} parent=5 // pred_region
        %s757 = ssub.s32 %s12, 2
      $region60: #{tpu_custom_call.1} parent=5 // pred_fallthru
        _
    $region6: #{tpu_custom_call.1} parent=1 // loop_footer
      %s16 = sadd.s32 1, %s12
    $region7: #{tpu_custom_call.1} parent=1 // loop_footer_branch
      %11 = sbr.rel target = $region3
    $region8: #{tpu_custom_call.1} parent=1 // loop_exit
      _
    %758 = vsyncpa [#allocation4], 1
    %s759 = scalar_lea.sflag [#allocation4], 1
    %760 = vsyncpa %s759, 1

</llo_original>
